<compile_context>
chip_gen: v6e
topology: v6e:2x2x1
jax: 0.10.0
libtpu: 0.0.40
codegen_flags: <defaults>
</compile_context>

<pallas_src>
import jax
import jax.numpy as jnp
from jax.experimental import pallas as pl
from jax.experimental.pallas import tpu as pltpu


def mlp_kernel(x_ref, w1_ref, bw_ref, b2_ref, out_ref):
    """One batch-tile of the MLP forward.

    x_ref:   (tm, D)  input rows                         (VMEM)
    w1_ref:  (D, H)   fc1.weight^T, resident across grid (VMEM)
    bw_ref:  (2, H)   row 0 = fc1.bias, row 1 = fc2.weight (packed, VMEM)
    b2_ref:  (1, 1)   fc2.bias scalar                    (SMEM)
    out_ref: (1, tm)  lane-dense output (batch on the lane axis)
    """
    x = x_ref[...]
    b1 = bw_ref[0:1, :]                      # (1, H)
    w2 = bw_ref[1:2, :]                      # (1, H)
    # fc1: single lane-dense MXU matmul with f32 accumulate; ReLU on the VPU.
    h = jnp.dot(x, w1_ref[...], preferred_element_type=jnp.float32) + b1
    h = jnp.maximum(h, 0.0)
    # fc2 has one output column: VPU multiply + XLU lane-reduce instead of an
    # N=1 MXU matmul (avoids a wasted MXU push/drain).
    s = jnp.sum(h * w2, axis=-1)             # (tm,)
    out_ref[...] = s.reshape(1, -1) + b2_ref[0, 0]   # unmasked lane-dense store


def prepare_params(params):
    """One-time conversion of PyTorch-layout params to kernel layout."""
    w1 = jnp.asarray(params["fc1_w"], jnp.float32)        # (H, D)
    b1 = jnp.asarray(params["fc1_b"], jnp.float32)        # (H,)
    w2 = jnp.asarray(params["fc2_w"], jnp.float32)        # (1, H)
    b2 = jnp.asarray(params["fc2_b"], jnp.float32)        # (1,)
    H = w1.shape[0]
    w1_t = w1.T                                            # (D, H)
    bw = jnp.stack([b1.reshape(H), w2.reshape(H)], axis=0)  # (2, H)
    b2s = b2.reshape(1, 1)                                 # (1, 1)
    return (w1_t, bw, b2s)


def pytorch_mlp_forward(x, prepped, *, tm=512):
    """x: (B, D, 1) or (B, D) float32. Returns (B, 1).

    Note: torch.squeeze(x) would also drop the batch dim when B == 1; here the
    batch dim is kept explicit (only the trailing singleton feature axis is
    removed), which matches the module's intended per-sample semantics.
    """
    w1_t, bw, b2 = prepped
    D, H = w1_t.shape
    B = x.shape[0]
    x2 = x.reshape(B, -1)
    if x2.dtype != w1_t.dtype:
        x2 = x2.astype(w1_t.dtype)

    if B <= tm:
        blk_m, n_blocks, b_pad = B, 1, B
    else:
        blk_m = tm                       # multiple of 8 (sublanes) and 128 (lanes)
        n_blocks = pl.cdiv(B, blk_m)
        b_pad = n_blocks * blk_m
        if b_pad != B:
            x2 = jnp.pad(x2, ((0, b_pad - B), (0, 0)))

    cost = pl.CostEstimate(
        flops=2 * b_pad * D * H + 2 * b_pad * H,
        transcendentals=0,
        bytes_accessed=4 * (b_pad * D + D * H + 2 * H + 1 + b_pad),
    )

    out = pl.pallas_call(
        mlp_kernel,
        out_shape=jax.ShapeDtypeStruct((1, b_pad), jnp.float32),
        grid=(n_blocks,),
        in_specs=[
            pl.BlockSpec((blk_m, D), lambda i: (i, 0)),            # x tile
            pl.BlockSpec((D, H), lambda i: (0, 0)),                # w1^T, resident
            pl.BlockSpec((2, H), lambda i: (0, 0)),                # [b1; w2], resident
            pl.BlockSpec((1, 1), lambda i: (0, 0),
                         memory_space=pltpu.MemorySpace.SMEM),     # fc2 bias scalar
        ],
        out_specs=pl.BlockSpec((1, blk_m), lambda i: (0, i)),      # lane-dense out
        compiler_params=pltpu.CompilerParams(
            dimension_semantics=("parallel",)),
        cost_estimate=cost,
    )(x2, w1_t, bw, b2)

    res = out.reshape(b_pad, 1)
    return res if b_pad == B else res[:B]


def reference_forward(x, params):
    """Pure-JAX reference mirroring the PyTorch module."""
    B = x.shape[0]
    y = x.reshape(B, -1).astype(jnp.float32)
    h = y @ params["fc1_w"].T + params["fc1_b"]
    h = jnp.maximum(h, 0.0)
    return h @ params["fc2_w"].T + params["fc2_b"]


def init_params(key, inputsize):
    """Deterministic init matching PyTorch Linear shapes."""
    hidden = round(inputsize / 2)
    ks = jax.random.split(key, 4)
    b1 = 1.0 / jnp.sqrt(inputsize)
    b2 = 1.0 / jnp.sqrt(hidden)
    u = lambda k, shape, b: jax.random.uniform(k, shape, jnp.float32, -b, b)
    return {
        "fc1_w": u(ks[0], (hidden, inputsize), b1),  # fc1.weight
        "fc1_b": u(ks[1], (hidden,), b1),            # fc1.bias
        "fc2_w": u(ks[2], (1, hidden), b2),          # fc2.weight
        "fc2_b": u(ks[3], (1,), b2),                 # fc2.bias
    }


if __name__ == "__main__":
    key = jax.random.PRNGKey(0)
    kx, kp, kxb = jax.random.split(key, 3)

    D = 64                                   # inputsize -> hidden = 32
    params = init_params(kp, D)
    prepped = prepare_params(params)         # one-time param prep (hoisted)

    # Small case: batch=2 of 1D series with a trailing singleton axis.
    B = 2
    x = jax.random.normal(kx, (B, D, 1), jnp.float32)
    out = jax.block_until_ready(pytorch_mlp_forward(x, prepped))
    ref = reference_forward(x, params)
    assert out.shape == (B, 1)
    assert jnp.allclose(out, ref, atol=1e-5, rtol=1e-5), (out, ref)

    # Batched case: grid over the batch axis (2 tiles of 512 rows).
    Bb = 1024
    xb = jax.random.normal(kxb, (Bb, D, 1), jnp.float32)
    outb = jax.block_until_ready(pytorch_mlp_forward(xb, prepped))
    refb = reference_forward(xb, params)
    assert outb.shape == (Bb, 1)
    assert jnp.allclose(outb, refb, atol=1e-4, rtol=1e-4)

    print("KERNEL_OK")
</pallas_src>

<mosaic_0001>
module attributes {stable_mosaic.version = 11 : i64} {
  func.func @mlp_kernel(%arg0: i32, %arg1: memref<2x64xf32, #tpu.memory_space<vmem>>, %arg2: memref<64x32xf32, #tpu.memory_space<vmem>>, %arg3: memref<2x32xf32, #tpu.memory_space<vmem>>, %arg4: memref<1x1xf32, #tpu.memory_space<smem>>, %arg5: memref<1x2xf32, #tpu.memory_space<vmem>>) attributes {dimension_semantics = [#tpu.dimension_semantics<parallel>], iteration_bounds = array<i64: 1>, scalar_prefetch = 0 : i64, scratch_operands = 0 : i64, tpu.core_type = #tpu.core_type<tc>, window_params = [{transform_indices = @transform_0, window_bounds = array<i64: 2, 64>}, {pipeline_mode = #tpu.pipeline_mode<synchronous>, transform_indices = @transform_1, window_bounds = array<i64: 64, 32>}, {pipeline_mode = #tpu.pipeline_mode<synchronous>, transform_indices = @transform_2, window_bounds = array<i64: 2, 32>}, {transform_indices = @transform_3, window_bounds = array<i64: 1, 1>}, {transform_indices = @transform_4, window_bounds = array<i64: 1, 2>}]} {
    %c0 = arith.constant 0 : index
    %c0_0 = arith.constant 0 : index
    %0 = vector.load %arg1[%c0, %c0_0] : memref<2x64xf32, #tpu.memory_space<vmem>>, vector<2x64xf32>
    %c0_1 = arith.constant 0 : index
    %c0_2 = arith.constant 0 : index
    %1 = vector.load %arg3[%c0_1, %c0_2] : memref<2x32xf32, #tpu.memory_space<vmem>>, vector<1x32xf32>
    %c1 = arith.constant 1 : index
    %c0_3 = arith.constant 0 : index
    %2 = vector.load %arg3[%c1, %c0_3] : memref<2x32xf32, #tpu.memory_space<vmem>>, vector<1x32xf32>
    %c0_4 = arith.constant 0 : index
    %c0_5 = arith.constant 0 : index
    %3 = vector.load %arg2[%c0_4, %c0_5] : memref<64x32xf32, #tpu.memory_space<vmem>>, vector<64x32xf32>
    %cst = arith.constant dense<0.000000e+00> : vector<2x32xf32>
    %4 = tpu.matmul %0, %3, %cst {dimension_numbers = #tpu.dot_dimension_numbers<[1], [0], [0], [1], [0, 0, 1, 1], [], []>} : vector<2x64xf32>, vector<64x32xf32>, vector<2x32xf32> -> vector<2x32xf32>
    %5 = vector.broadcast %1 : vector<1x32xf32> to vector<2x32xf32>
    %6 = arith.addf %4, %5 : vector<2x32xf32>
    %cst_6 = arith.constant 0.000000e+00 : f32
    %7 = vector.broadcast %cst_6 : f32 to vector<2x32xf32>
    %8 = arith.maximumf %6, %7 : vector<2x32xf32>
    %9 = vector.broadcast %2 : vector<1x32xf32> to vector<2x32xf32>
    %10 = arith.mulf %8, %9 : vector<2x32xf32>
    %cst_7 = arith.constant dense<0.000000e+00> : vector<2xf32>
    %11 = vector.multi_reduction <add>, %10, %cst_7 [1] : vector<2x32xf32> to vector<2xf32>
    %12 = vector.shape_cast %11 : vector<2xf32> to vector<1x2xf32>
    %c0_8 = arith.constant 0 : index
    %c0_9 = arith.constant 0 : index
    %13 = memref.load %arg4[%c0_8, %c0_9] : memref<1x1xf32, #tpu.memory_space<smem>>
    %14 = vector.broadcast %13 : f32 to vector<1x2xf32>
    %15 = arith.addf %12, %14 : vector<1x2xf32>
    %c0_10 = arith.constant 0 : index
    %c0_11 = arith.constant 0 : index
    %16 = vector.load %arg5[%c0_10, %c0_11] : memref<1x2xf32, #tpu.memory_space<vmem>>, vector<1x2xf32>
    tpu.vector_store %arg5[%c0_10, %c0_11], %15 {strides = array<i32>} : memref<1x2xf32, #tpu.memory_space<vmem>>, vector<1x2xf32>,
    return
  }
  func.func @transform_0(%arg0: i32) -> (i32, i32) {
    %c0_i32 = arith.constant 0 : i32
    %c0_i32_0 = arith.constant 0 : i32
    return %arg0, %c0_i32 : i32, i32
  }
  func.func @transform_1(%arg0: i32) -> (i32, i32) {
    %c0_i32 = arith.constant 0 : i32
    %c0_i32_0 = arith.constant 0 : i32
    %c0_i32_1 = arith.constant 0 : i32
    return %c0_i32, %c0_i32_0 : i32, i32
  }
  func.func @transform_2(%arg0: i32) -> (i32, i32) {
    %c0_i32 = arith.constant 0 : i32
    %c0_i32_0 = arith.constant 0 : i32
    %c0_i32_1 = arith.constant 0 : i32
    return %c0_i32, %c0_i32_0 : i32, i32
  }
  func.func @transform_3(%arg0: i32) -> (i32, i32) {
    %c0_i32 = arith.constant 0 : i32
    %c0_i32_0 = arith.constant 0 : i32
    %c0_i32_1 = arith.constant 0 : i32
    return %c0_i32, %c0_i32_0 : i32, i32
  }
  func.func @transform_4(%arg0: i32) -> (i32, i32) {
    %c0_i32 = arith.constant 0 : i32
    %c0_i32_0 = arith.constant 0 : i32
    return %c0_i32, %arg0 : i32, i32
  }
}

</mosaic_0001>

<llo_original>
// kernel: tpu_custom_call.1
$region0: #{tpu_custom_call.1}
  #allocation0 [shape = 'u32[]', space=smem, size = 0x4, offset = 0x4, fixed_abs, tag = 'smem constant byte address 0x4 - core index']
  #allocation1 [shape = 'u32[144,128]{1,0:T(1,128)}', space=vmem, size = 0x12000, scoped, tag = 'internal scratch']
  #allocation2 [shape = 'f32[1,1]{1,0:T(1,128)S(6)}', space=smem, size = 0x200, scoped, tag = 'scoped memory for tpu_custom_call.1']
  %s0 = inlined_call_operand.vmem [shape: f32[2,64], index: 0, kind: input, shape index: {}]
  %s1 = inlined_call_operand.vmem [shape: f32[64,32], index: 1, kind: input, shape index: {}]
  %s2 = inlined_call_operand.vmem [shape: f32[2,32], index: 2, kind: input, shape index: {}]
  %s3 = inlined_call_operand.<no memory space> [shape: f32[1,1], index: 3, kind: input, shape index: {}]
  %s4 = inlined_call_operand.hbm [shape: f32[1,2], index: 4, kind: output, shape index: {}]
  %s5 = sld [smem:[#allocation0]]
  $region26: #{tpu_custom_call.1} parent=0
    _
  %s7 = ssub.s32 1, %s5
  %s8 = scalar_select 0, %s7, %s5
  %9 = sst [smem:[#allocation2]] %s3
  $region1: #{tpu_custom_call.1} parent=0
    #allocation3 [shape = 'u8[512]{0}', space=vmem, size = 0x400, scoped, tag = 'output window, operand 0, single buffered']
    #allocation4 [shape = 's32[1]{0}', space=sflag, size = 0x4, scoped, tag = 'scoped memory for tpu_custom_call.1']
    %10 = vsyncpa [#allocation4], 0
    // Predicated region
    $region2: #{tpu_custom_call.1} parent=1 // pred_check
      _
    $region3: #{tpu_custom_call.1} parent=1 // pred_check_branch
      %12 = sbr.rel (0) target = $region5
    $region4: #{tpu_custom_call.1} parent=1 // pred_region
      _
    $region5: #{tpu_custom_call.1} parent=1 // pred_fallthru
      _
    // Predicated region
    $region6: #{tpu_custom_call.1} parent=1 // pred_check
      _
    $region7: #{tpu_custom_call.1} parent=1 // pred_check_branch
      %14 = sbr.rel (0) target = $region9
    $region8: #{tpu_custom_call.1} parent=1 // pred_region
      _
    $region9: #{tpu_custom_call.1} parent=1 // pred_fallthru
      _
    // Predicated region
    $region10: #{tpu_custom_call.1} parent=1 // pred_check
      _
    $region11: #{tpu_custom_call.1} parent=1 // pred_check_branch
      %16 = sbr.rel (0) target = $region13
    $region12: #{tpu_custom_call.1} parent=1 // pred_region
      _
    $region13: #{tpu_custom_call.1} parent=1 // pred_fallthru
      _
    // Predicated region
    $region14: #{tpu_custom_call.1} parent=1 // pred_check
      _
    $region15: #{tpu_custom_call.1} parent=1 // pred_check_branch
      %18 = sbr.rel (0) target = $region17
    $region16: #{tpu_custom_call.1} parent=1 // pred_region
      _
    $region17: #{tpu_custom_call.1} parent=1 // pred_fallthru
      _
    %v19 = vld [vmem:[%s0] sm:$0x3]
    %v20 = vld [vmem:[%s2] sm:$0x1]
    %v21 = vld [vmem:[%s2 + $0x1] sm:$0x1]
    %v22 = vld [vmem:[%s1] sm:$0xff]
    %v23 = vld [vmem:[%s1 + $0x8] sm:$0xff]
    %v24 = vld [vmem:[%s1 + $0x10] sm:$0xff]
    %v25 = vld [vmem:[%s1 + $0x18] sm:$0xff]
    %v26 = vld [vmem:[%s1 + $0x20] sm:$0xff]
    %v27 = vld [vmem:[%s1 + $0x28] sm:$0xff]
    %v28 = vld [vmem:[%s1 + $0x30] sm:$0xff]
    %v29 = vld [vmem:[%s1 + $0x38] sm:$0xff]
    %v30 = vlaneseq
    %v31 = vshrl.u32 %v30, 7
    %v32 = vsub.s32 0, %v31
    %v33 = vrot.slane %v20, %v32
    %vm34 = vcmask 523264
    %v36 = vsel %vm34, %v19, 0
    %38 = vmatprep.subr.mxu0 0.0
    %39 = vmatpush1.msra.mxu0 0.0
    %40 = vmatprep.subr.mxu0 0.0
    %41 = vmatpush1.msra.mxu0 0.0
    %42 = vmatprep.subr.mxu0 0.0
    %43 = vmatpush1.msra.mxu0 0.0
    %44 = vmatprep.subr.mxu0 0.0
    %45 = vmatpush1.msra.mxu0 0.0
    %46 = vmatprep.subr.mxu0 0.0
    %47 = vmatpush1.msra.mxu0 0.0
    %48 = vmatprep.subr.mxu0 0.0
    %49 = vmatpush1.msra.mxu0 0.0
    %50 = vmatprep.subr.mxu0 0.0
    %51 = vmatpush1.msra.mxu0 0.0
    %52 = vmatprep.subr.mxu0 0.0
    %53 = vmatpush1.msra.mxu0 0.0
    %54 = vmatprep.subr.mxu0 0.0
    %55 = vmatpush1.msra.mxu0 %v29
    %56 = vmatprep.subr.mxu0 0.0
    %57 = vmatpush1.msra.mxu0 %v28
    %58 = vmatprep.subr.mxu0 0.0
    %59 = vmatpush1.msra.mxu0 %v27
    %60 = vmatprep.subr.mxu0 0.0
    %61 = vmatpush1.msra.mxu0 %v26
    %62 = vmatprep.subr.mxu0 0.0
    %63 = vmatpush1.msra.mxu0 %v25
    %64 = vmatprep.subr.mxu0 0.0
    %65 = vmatpush1.msra.mxu0 %v24
    %66 = vmatprep.subr.mxu0 0.0
    %67 = vmatpush1.msra.mxu0 %v23
    %68 = vmatprep.subr.mxu0 0.0
    %69 = vmatpush1.msra.mxu0 %v22
    %70 = vmatprep.subr.mxu0 0.0
    %71 = vmatpush2.msra.mxu0 0.0
    %72 = vmatprep.subr.mxu0 0.0
    %73 = vmatpush2.msra.mxu0 0.0
    %74 = vmatprep.subr.mxu0 0.0
    %75 = vmatpush2.msra.mxu0 0.0
    %76 = vmatprep.subr.mxu0 0.0
    %77 = vmatpush2.msra.mxu0 0.0
    %78 = vmatprep.subr.mxu0 0.0
    %79 = vmatpush2.msra.mxu0 0.0
    %80 = vmatprep.subr.mxu0 0.0
    %81 = vmatpush2.msra.mxu0 0.0
    %82 = vmatprep.subr.mxu0 0.0
    %83 = vmatpush2.msra.mxu0 0.0
    %84 = vmatprep.subr.mxu0 0.0
    %85 = vmatpush2.msra.mxu0 0.0
    %86 = vmatprep.subr.mxu0 0.0
    %87 = vmatpush2.msra.mxu0 0.0
    %88 = vmatprep.subr.mxu0 0.0
    %89 = vmatpush2.msra.mxu0 0.0
    %90 = vmatprep.subr.mxu0 0.0
    %91 = vmatpush2.msra.mxu0 0.0
    %92 = vmatprep.subr.mxu0 0.0
    %93 = vmatpush2.msra.mxu0 0.0
    %94 = vmatprep.subr.mxu0 0.0
    %95 = vmatpush2.msra.mxu0 0.0
    %96 = vmatprep.subr.mxu0 0.0
    %97 = vmatpush2.msra.mxu0 0.0
    %98 = vmatprep.subr.mxu0 0.0
    %99 = vmatpush2.msra.mxu0 0.0
    %100 = vmatprep.subr.mxu0 0.0
    %101 = vmatpush2.msra.mxu0 0.0
    %102 = vmatprep.mubr.f32.mxu0 0.0
    %103 = vmatmul.mubr.f32.gmra.mxu0 %v36
    %v104 = vpop.f32.mrf.mxu0
    %v105 = vadd.f32 %v33, %v104
    %v106 = vpop.f32.mrf.mxu0
    %107 = vdwg.mxu0
    %v108 = vmax.f32 %v105, 0.0
    %v109 = vlaneseq
    %v110 = vshrl.u32 %v109, 7
    %v111 = vsub.s32 0, %v110
    %v112 = vrot.slane %v21, %v111
    %v113 = vmul.f32 %v108, %v112
    %vm114 = vcmask 254976
    %v115 = vsel %vm114, %v113, 0.0
    %116 = vadd.xlane.f32.xlu0 %v115
    %v117 = vpop.xlane.xlu0 %116
    %s118 = sld [smem:[#allocation2]]
    %v119 = vstv %s118
    %v120 = vadd.f32 %v117, %v119
    %v122 = vlaneseq
    %v123 = vand.u32 %v122, 127
    %v124 = vlaneseq
    %v125 = vshrl.u32 %v124, 7
    %v126 = vsub.s32 %v123, %v125
    %v127 = vrot.slane %v120, %v126
    %vm129 = vcmask 8192
    %130 = vst.msk [vmem:[#allocation3] sm:$0x1] %vm129, %v127
    // Predicated region
    $region18: #{tpu_custom_call.1} parent=1 // pred_check
      _
    $region19: #{tpu_custom_call.1} parent=1 // pred_check_branch
      %132 = sbr.rel (0) target = $region21
    $region20: #{tpu_custom_call.1} parent=1 // pred_region
      %s134 = ssub.s32 16, 16
      %135 = vsyncadd [#allocation4], %s134
      %s137 = sshll.u32 [#allocation3], 4
      %s138 = int_to_ptr.vmem [resolvable:$true] %s137
      %140 = dma.vmem_to_hbm [thread:$0]  %s138, 16, %s4, [#allocation4]
    $region21: #{tpu_custom_call.1} parent=1 // pred_fallthru
      _
    // Predicated region
    $region22: #{tpu_custom_call.1} parent=1 // pred_check
      _
    $region23: #{tpu_custom_call.1} parent=1 // pred_check_branch
      %142 = sbr.rel (0) target = $region25
    $region24: #{tpu_custom_call.1} parent=1 // pred_region
      %143 = dma.done [#allocation4], 16
    $region25: #{tpu_custom_call.1} parent=1 // pred_fallthru
      _
    %144 = vsyncpa [#allocation4], 1

</llo_original>
